<compile_context>
chip_gen: v7x
topology: tpu7x:2x2x1
jax: 0.10.0
libtpu: 0.0.40
codegen_flags: <defaults>
</compile_context>

<pallas_src>
import jax
import jax.numpy as jnp
from jax.experimental import pallas as pl
from jax.experimental.pallas import tpu as pltpu


def _round_up(x: int, m: int) -> int:
    return (x + m - 1) // m * m


def _pick_tile(padded: int, unit: int, max_tile: int) -> int:
    """Largest multiple of `unit` that divides `padded` and is <= max_tile."""
    t = min(_round_up(max_tile, unit), padded)
    t = t - (t % unit) if t % unit else t
    while t >= unit:
        if padded % t == 0:
            return t
        t -= unit
    return unit


def _split_for_parallelism(padded: int, unit: int, tile: int) -> int:
    """Pick a smaller dividing tile so there are >= 2 grid steps, if possible."""
    if padded // tile >= 2 or padded // unit < 2:
        return tile
    t = tile - unit
    while t >= unit:
        if padded % t == 0 and padded // t >= 2:
            return t
        t -= unit
    return tile


def _addmm_bias_kernel(x1b_ref, x3_ref, x2_ref, o_ref):
    k = pl.program_id(2)

    @pl.when(k == 0)
    def _():
        # addmm addend with the broadcast bias already folded in (wrapper).
        o_ref[...] = x1b_ref[...].astype(jnp.float32)

    o_ref[...] += jnp.dot(
        x3_ref[...], x2_ref[...], preferred_element_type=jnp.float32
    )


def addmm_plus_bias(
    x1,
    x2,
    x3,
    inp,
    *,
    tm: int = 256,
    tn: int = 512,
    tk: int = 1024,
    use_bf16_operands: bool = False,
):
    """torch.addmm(x1, x3, x2) + inp, tiled over an (M, N, K) grid."""
    M, K = x3.shape
    K2, N = x2.shape
    assert K == K2 and x1.shape == (M, N) and inp.shape == (N,)

    # Pad only to layout alignment (8 sublanes, 128 lanes), not tile multiples.
    Mp, Np, Kp = _round_up(M, 8), _round_up(N, 128), _round_up(K, 128)

    # Tiles must divide the padded dims exactly (no masked edges needed).
    tm = _pick_tile(Mp, 8, tm)
    tn = _pick_tile(Np, 128, tn)
    tk = _pick_tile(Kp, 128, tk)

    # Keep >= 2 parallel (M, N) grid steps when possible (v7x: 2 TensorCores).
    if (Mp // tm) * (Np // tn) < 2:
        new_tn = _split_for_parallelism(Np, 128, tn)
        if new_tn != tn:
            tn = new_tn
        else:
            tm = _split_for_parallelism(Mp, 8, tm)

    f32 = jnp.float32
    op_dtype = jnp.bfloat16 if use_bf16_operands else x3.dtype

    # Bias folded into the addend; zero-pad K (required), and M/N to alignment.
    x1p = jnp.pad((x1 + inp[None, :]).astype(f32), ((0, Mp - M), (0, Np - N)))
    x2p = jnp.pad(x2.astype(op_dtype), ((0, Kp - K), (0, Np - N)))
    x3p = jnp.pad(x3.astype(op_dtype), ((0, Mp - M), (0, Kp - K)))

    grid = (Mp // tm, Np // tn, Kp // tk)
    op_bytes = jnp.dtype(op_dtype).itemsize

    cost = pl.CostEstimate(
        flops=2 * Mp * Np * Kp,
        bytes_accessed=op_bytes * (Mp * Kp + Kp * Np) + 4 * 2 * Mp * Np,
        transcendentals=0,
    )

    out_padded = pl.pallas_call(
        _addmm_bias_kernel,
        out_shape=jax.ShapeDtypeStruct((Mp, Np), f32),
        grid=grid,
        in_specs=[
            pl.BlockSpec((tm, tn), lambda i, j, k: (i, j)),  # x1 + bias (addend)
            pl.BlockSpec((tm, tk), lambda i, j, k: (i, k)),  # x3 (lhs)
            pl.BlockSpec((tk, tn), lambda i, j, k: (k, j)),  # x2 (rhs)
        ],
        out_specs=pl.BlockSpec((tm, tn), lambda i, j, k: (i, j)),
        compiler_params=pltpu.CompilerParams(
            dimension_semantics=("parallel", "parallel", "arbitrary"),
            vmem_limit_bytes=32 * 1024 * 1024,
        ),
        cost_estimate=cost,
    )(x1p, x3p, x2p)

    out = out_padded[:M, :N]
    return out.astype(x1.dtype)


def _reference(x1, x2, x3, inp):
    return x1 + x3 @ x2 + inp[None, :]


if __name__ == "__main__":
    key = jax.random.PRNGKey(0)
    k1, k2, k3, k4, k5, k6, k7, k8 = jax.random.split(key, 8)

    # --- Shapes from the module spec: x1, x2, x3 are (3, 3); inp is (3,) ---
    x1 = jax.random.normal(k1, (3, 3), dtype=jnp.float32)
    x2 = jax.random.normal(k2, (3, 3), dtype=jnp.float32)
    x3 = jax.random.normal(k3, (3, 3), dtype=jnp.float32)
    inp = jax.random.normal(k4, (3,), dtype=jnp.float32)

    out = jax.block_until_ready(addmm_plus_bias(x1, x2, x3, inp))
    ref = _reference(x1, x2, x3, inp)
    assert out.shape == ref.shape
    assert jnp.allclose(out, ref, atol=1e-5, rtol=1e-5), (out, ref)

    # --- Non-tile-aligned larger shapes to exercise the tiled / padded path ---
    M, K, N = 272, 384, 320
    y1 = jax.random.normal(k5, (M, N), dtype=jnp.float32)
    y2 = jax.random.normal(k6, (K, N), dtype=jnp.float32)
    y3 = jax.random.normal(k7, (M, K), dtype=jnp.float32)
    yb = jax.random.normal(k8, (N,), dtype=jnp.float32)

    out2 = jax.block_until_ready(addmm_plus_bias(y1, y2, y3, yb))
    ref2 = _reference(y1, y2, y3, yb)
    assert out2.shape == ref2.shape
    assert jnp.allclose(out2, ref2, atol=1e-4, rtol=1e-4)

    print("KERNEL_OK")
</pallas_src>

<mosaic_0001>
module attributes {stable_mosaic.version = 11 : i64} {
  func.func @_addmm_bias_kernel(%arg0: i32, %arg1: i32, %arg2: i32, %arg3: memref<8x128xf32, #tpu.memory_space<vmem>>, %arg4: memref<8x128xf32, #tpu.memory_space<vmem>>, %arg5: memref<128x128xf32, #tpu.memory_space<vmem>>, %arg6: memref<8x128xf32, #tpu.memory_space<vmem>>) attributes {dimension_semantics = [#tpu.dimension_semantics<parallel>, #tpu.dimension_semantics<parallel>, #tpu.dimension_semantics<arbitrary>], iteration_bounds = array<i64: 1, 1, 1>, scalar_prefetch = 0 : i64, scratch_operands = 0 : i64, tpu.core_type = #tpu.core_type<tc>, window_params = [{transform_indices = @transform_0, window_bounds = array<i64: 8, 128>}, {transform_indices = @transform_1, window_bounds = array<i64: 8, 128>}, {transform_indices = @transform_2, window_bounds = array<i64: 128, 128>}, {transform_indices = @transform_3, window_bounds = array<i64: 8, 128>}]} {
    %c0_i32 = arith.constant 0 : i32
    %0 = arith.cmpi eq, %arg2, %c0_i32 : i32
    %1 = arith.extui %0 : i1 to i32
    %c0_i32_0 = arith.constant 0 : i32
    %2 = arith.cmpi ne, %1, %c0_i32_0 : i32
    scf.if %2 {
      %c0_8 = arith.constant 0 : index
      %c0_9 = arith.constant 0 : index
      %9 = vector.load %arg3[%c0_8, %c0_9] : memref<8x128xf32, #tpu.memory_space<vmem>>, vector<8x128xf32>
      %c0_10 = arith.constant 0 : index
      %c0_11 = arith.constant 0 : index
      %10 = vector.load %arg6[%c0_10, %c0_11] : memref<8x128xf32, #tpu.memory_space<vmem>>, vector<8x128xf32>
      tpu.vector_store %arg6[%c0_10, %c0_11], %9 {strides = array<i32>} : memref<8x128xf32, #tpu.memory_space<vmem>>, vector<8x128xf32>,
    } else {
    }
    %c0 = arith.constant 0 : index
    %c0_1 = arith.constant 0 : index
    %3 = vector.load %arg6[%c0, %c0_1] : memref<8x128xf32, #tpu.memory_space<vmem>>, vector<8x128xf32>
    %c0_2 = arith.constant 0 : index
    %c0_3 = arith.constant 0 : index
    %4 = vector.load %arg4[%c0_2, %c0_3] : memref<8x128xf32, #tpu.memory_space<vmem>>, vector<8x128xf32>
    %c0_4 = arith.constant 0 : index
    %c0_5 = arith.constant 0 : index
    %5 = vector.load %arg5[%c0_4, %c0_5] : memref<128x128xf32, #tpu.memory_space<vmem>>, vector<128x128xf32>
    %cst = arith.constant dense<0.000000e+00> : vector<8x128xf32>
    %6 = tpu.matmul %4, %5, %cst {dimension_numbers = #tpu.dot_dimension_numbers<[1], [0], [0], [1], [0, 0, 1, 1], [], []>} : vector<8x128xf32>, vector<128x128xf32>, vector<8x128xf32> -> vector<8x128xf32>
    %7 = arith.addf %3, %6 : vector<8x128xf32>
    %c0_6 = arith.constant 0 : index
    %c0_7 = arith.constant 0 : index
    %8 = vector.load %arg6[%c0_6, %c0_7] : memref<8x128xf32, #tpu.memory_space<vmem>>, vector<8x128xf32>
    tpu.vector_store %arg6[%c0_6, %c0_7], %7 {strides = array<i32>} : memref<8x128xf32, #tpu.memory_space<vmem>>, vector<8x128xf32>,
    return
  }
  func.func @transform_0(%arg0: i32, %arg1: i32, %arg2: i32) -> (i32, i32) {
    %c0_i32 = arith.constant 0 : i32
    return %arg0, %arg1 : i32, i32
  }
  func.func @transform_1(%arg0: i32, %arg1: i32, %arg2: i32) -> (i32, i32) {
    %c0_i32 = arith.constant 0 : i32
    return %arg0, %arg2 : i32, i32
  }
  func.func @transform_2(%arg0: i32, %arg1: i32, %arg2: i32) -> (i32, i32) {
    %c0_i32 = arith.constant 0 : i32
    return %arg2, %arg1 : i32, i32
  }
  func.func @transform_3(%arg0: i32, %arg1: i32, %arg2: i32) -> (i32, i32) {
    %c0_i32 = arith.constant 0 : i32
    return %arg0, %arg1 : i32, i32
  }
}

</mosaic_0001>

<llo_original>
// kernel: tpu_custom_call.1
$region0: #{tpu_custom_call.1}
  #allocation0 [shape = 'u32[]', space=smem, size = 0x4, offset = 0x4, fixed_abs, tag = 'smem constant byte address 0x4 - core index']
  #allocation1 [shape = 'u32[144,128]{1,0:T(1,128)}', space=vmem, size = 0x12000, scoped, tag = 'internal scratch']
  %s0 = inlined_call_operand.hbm [shape: f32[8,128], index: 0, kind: input, shape index: {}]
  %s1 = inlined_call_operand.hbm [shape: f32[8,128], index: 1, kind: input, shape index: {}]
  %s2 = inlined_call_operand.hbm [shape: f32[128,128], index: 2, kind: input, shape index: {}]
  %s3 = inlined_call_operand.hbm [shape: f32[8,128], index: 3, kind: output, shape index: {}]
  %s4 = sld [smem:[#allocation0]]
  $region38: #{tpu_custom_call.1} parent=0
    _
  %s6 = ssub.s32 1, %s4
  %s7 = scalar_select 0, %s6, %s4
  $region1: #{tpu_custom_call.1} parent=0
    #allocation2 [shape = 'u8[4096]{0}', space=vmem, size = 0x1000, scoped, tag = 'input window, operand 0, single buffered']
    #allocation3 [shape = 's32[1]{0}', space=sflag, size = 0x4, scoped, tag = 'scoped memory for tpu_custom_call.1']
    #allocation4 [shape = 's32[1]{0}', space=sflag, size = 0x4, scoped, tag = 'scoped memory for tpu_custom_call.1']
    #allocation5 [shape = 'u8[4096]{0}', space=vmem, size = 0x1000, scoped, tag = 'input window, operand 1, single buffered']
    #allocation6 [shape = 's32[1]{0}', space=sflag, size = 0x4, scoped, tag = 'scoped memory for tpu_custom_call.1']
    #allocation7 [shape = 'u8[65536]{0}', space=vmem, size = 0x10000, scoped, tag = 'input window, operand 2, single buffered']
    #allocation8 [shape = 'u8[4096]{0}', space=vmem, size = 0x1000, scoped, tag = 'output window, operand 0, single buffered']
    %8 = vsyncpa [#allocation3], 0
    %9 = vsyncpa [#allocation6], 0
    %10 = vsyncpa [#allocation4], 0
    // Predicated region
    $region2: #{tpu_custom_call.1} parent=1 // pred_check
      _
    $region3: #{tpu_custom_call.1} parent=1 // pred_check_branch
      %12 = sbr.rel (0) target = $region5
    $region4: #{tpu_custom_call.1} parent=1 // pred_region
      %s14 = ssub.s32 128, 128
      %15 = vsyncadd [#allocation3], %s14
      %s17 = sshll.u32 [#allocation2], 4
      %s18 = int_to_ptr.vmem [resolvable:$true] %s17
      %20 = dma.hbm_to_vmem [thread:$0]  %s0, 128, %s18, [#allocation3]
    $region5: #{tpu_custom_call.1} parent=1 // pred_fallthru
      _
    // Predicated region
    $region6: #{tpu_custom_call.1} parent=1 // pred_check
      _
    $region7: #{tpu_custom_call.1} parent=1 // pred_check_branch
      %22 = sbr.rel (0) target = $region9
    $region8: #{tpu_custom_call.1} parent=1 // pred_region
      %s24 = ssub.s32 128, 128
      %25 = vsyncadd [#allocation6], %s24
      %s27 = sshll.u32 [#allocation5], 4
      %s28 = int_to_ptr.vmem [resolvable:$true] %s27
      %30 = dma.hbm_to_vmem [thread:$0]  %s1, 128, %s28, [#allocation6]
    $region9: #{tpu_custom_call.1} parent=1 // pred_fallthru
      _
    // Predicated region
    $region10: #{tpu_custom_call.1} parent=1 // pred_check
      _
    $region11: #{tpu_custom_call.1} parent=1 // pred_check_branch
      %32 = sbr.rel (0) target = $region13
    $region12: #{tpu_custom_call.1} parent=1 // pred_region
      %s34 = ssub.s32 2048, 2048
      %35 = vsyncadd [#allocation6], %s34
      %s36 = sshll.u32 [#allocation7], 4
      %s37 = int_to_ptr.vmem [resolvable:$true] %s36
      %42 = dma.hbm_to_vmem [thread:$0]  %s2, 2048, %s37, [#allocation6], 128, 128, 8
    $region13: #{tpu_custom_call.1} parent=1 // pred_fallthru
      _
    // Predicated region
    $region14: #{tpu_custom_call.1} parent=1 // pred_check
      _
    $region15: #{tpu_custom_call.1} parent=1 // pred_check_branch
      %44 = sbr.rel (0) target = $region17
    $region16: #{tpu_custom_call.1} parent=1 // pred_region
      %45 = dma.done [#allocation3], 128
    $region17: #{tpu_custom_call.1} parent=1 // pred_fallthru
      _
    // Predicated region
    $region18: #{tpu_custom_call.1} parent=1 // pred_check
      _
    $region19: #{tpu_custom_call.1} parent=1 // pred_check_branch
      %47 = sbr.rel (0) target = $region21
    $region20: #{tpu_custom_call.1} parent=1 // pred_region
      %48 = dma.done [#allocation6], 128
    $region21: #{tpu_custom_call.1} parent=1 // pred_fallthru
      _
    // Predicated region
    $region22: #{tpu_custom_call.1} parent=1 // pred_check
      _
    $region23: #{tpu_custom_call.1} parent=1 // pred_check_branch
      %50 = sbr.rel (0) target = $region25
    $region24: #{tpu_custom_call.1} parent=1 // pred_region
      %51 = dma.done [#allocation6], 2048
    $region25: #{tpu_custom_call.1} parent=1 // pred_fallthru
      _
    %p52 = scmp.eq.s32.totalorder 0, 0
    // Predicated region
    $region26: #{tpu_custom_call.1} parent=1 // pred_check
      %p53 = pneg %p52
    $region27: #{tpu_custom_call.1} parent=1 // pred_check_branch
      %55 = sbr.rel (%p53) target = $region29
    $region28: #{tpu_custom_call.1} parent=1 // pred_region
      %v56 = vld [vmem:[#allocation2] sm:$0xff]
      %57 = vst [vmem:[#allocation8] sm:$0xff] %v56
    $region29: #{tpu_custom_call.1} parent=1 // pred_fallthru
      _
    %v58 = vld [vmem:[#allocation8] sm:$0xff]
    %v59 = vld [vmem:[#allocation5] sm:$0xff]
    %v60 = vld [vmem:[#allocation7] sm:$0xff]
    %v61 = vld [vmem:[#allocation7 + $0x8] sm:$0xff]
    %v62 = vld [vmem:[#allocation7 + $0x10] sm:$0xff]
    %v63 = vld [vmem:[#allocation7 + $0x18] sm:$0xff]
    %v64 = vld [vmem:[#allocation7 + $0x20] sm:$0xff]
    %v65 = vld [vmem:[#allocation7 + $0x28] sm:$0xff]
    %v66 = vld [vmem:[#allocation7 + $0x30] sm:$0xff]
    %v67 = vld [vmem:[#allocation7 + $0x38] sm:$0xff]
    %v68 = vld [vmem:[#allocation7 + $0x40] sm:$0xff]
    %v69 = vld [vmem:[#allocation7 + $0x48] sm:$0xff]
    %v70 = vld [vmem:[#allocation7 + $0x50] sm:$0xff]
    %v71 = vld [vmem:[#allocation7 + $0x58] sm:$0xff]
    %v72 = vld [vmem:[#allocation7 + $0x60] sm:$0xff]
    %v73 = vld [vmem:[#allocation7 + $0x68] sm:$0xff]
    %v74 = vld [vmem:[#allocation7 + $0x70] sm:$0xff]
    %v75 = vld [vmem:[#allocation7 + $0x78] sm:$0xff]
    %76 = vmatprep.subr.mxu0 0.0
    %77 = vmatpush1.msra.mxu0 %v60
    %78 = vmatprep.subr.mxu0 0.0
    %79 = vmatpush1.msra.mxu0 %v61
    %80 = vmatprep.subr.mxu0 0.0
    %81 = vmatpush1.msra.mxu0 %v62
    %82 = vmatprep.subr.mxu0 0.0
    %83 = vmatpush1.msra.mxu0 %v63
    %84 = vmatprep.subr.mxu0 0.0
    %85 = vmatpush1.msra.mxu0 %v64
    %86 = vmatprep.subr.mxu0 0.0
    %87 = vmatpush1.msra.mxu0 %v65
    %88 = vmatprep.subr.mxu0 0.0
    %89 = vmatpush1.msra.mxu0 %v66
    %90 = vmatprep.subr.mxu0 0.0
    %91 = vmatpush1.msra.mxu0 %v67
    %92 = vmatprep.subr.mxu0 0.0
    %93 = vmatpush1.msra.mxu0 %v68
    %94 = vmatprep.subr.mxu0 0.0
    %95 = vmatpush1.msra.mxu0 %v69
    %96 = vmatprep.subr.mxu0 0.0
    %97 = vmatpush1.msra.mxu0 %v70
    %98 = vmatprep.subr.mxu0 0.0
    %99 = vmatpush1.msra.mxu0 %v71
    %100 = vmatprep.subr.mxu0 0.0
    %101 = vmatpush1.msra.mxu0 %v72
    %102 = vmatprep.subr.mxu0 0.0
    %103 = vmatpush1.msra.mxu0 %v73
    %104 = vmatprep.subr.mxu0 0.0
    %105 = vmatpush1.msra.mxu0 %v74
    %106 = vmatprep.subr.mxu0 0.0
    %107 = vmatpush1.msra.mxu0 %v75
    %108 = vmatprep.subr.mxu0 0.0
    %109 = vmatpush1.msra.mxu0 0.0
    %110 = vmatprep.subr.mxu0 0.0
    %111 = vmatpush1.msra.mxu0 0.0
    %112 = vmatprep.subr.mxu0 0.0
    %113 = vmatpush1.msra.mxu0 0.0
    %114 = vmatprep.subr.mxu0 0.0
    %115 = vmatpush1.msra.mxu0 0.0
    %116 = vmatprep.subr.mxu0 0.0
    %117 = vmatpush1.msra.mxu0 0.0
    %118 = vmatprep.subr.mxu0 0.0
    %119 = vmatpush1.msra.mxu0 0.0
    %120 = vmatprep.subr.mxu0 0.0
    %121 = vmatpush1.msra.mxu0 0.0
    %122 = vmatprep.subr.mxu0 0.0
    %123 = vmatpush1.msra.mxu0 0.0
    %124 = vmatprep.subr.mxu0 0.0
    %125 = vmatpush1.msra.mxu0 0.0
    %126 = vmatprep.subr.mxu0 0.0
    %127 = vmatpush1.msra.mxu0 0.0
    %128 = vmatprep.subr.mxu0 0.0
    %129 = vmatpush1.msra.mxu0 0.0
    %130 = vmatprep.subr.mxu0 0.0
    %131 = vmatpush1.msra.mxu0 0.0
    %132 = vmatprep.subr.mxu0 0.0
    %133 = vmatpush1.msra.mxu0 0.0
    %134 = vmatprep.subr.mxu0 0.0
    %135 = vmatpush1.msra.mxu0 0.0
    %136 = vmatprep.subr.mxu0 0.0
    %137 = vmatpush1.msra.mxu0 0.0
    %138 = vmatprep.subr.mxu0 0.0
    %139 = vmatpush1.msra.mxu0 0.0
    %140 = vmatprep.mubr.f32.mxu0 0.0
    %141 = vmatmul.mubr.f32.gmra.mrb[0].mxu0 %v59
    %v142 = vpop.f32.mrb[0].mxu0
    %v143 = vadd.f32 0.0, %v142
    %v144 = vpop.f32.mrb[0].mxu0
    %145 = vdwg.mxu0
    %v146 = vadd.f32 %v58, %v143
    %147 = vst [vmem:[#allocation8] sm:$0xff] %v146
    // Predicated region
    $region30: #{tpu_custom_call.1} parent=1 // pred_check
      _
    $region31: #{tpu_custom_call.1} parent=1 // pred_check_branch
      %149 = sbr.rel (0) target = $region33
    $region32: #{tpu_custom_call.1} parent=1 // pred_region
      %s151 = ssub.s32 128, 128
      %152 = vsyncadd [#allocation4], %s151
      %s154 = sshll.u32 [#allocation8], 4
      %s155 = int_to_ptr.vmem [resolvable:$true] %s154
      %157 = dma.vmem_to_hbm [thread:$0]  %s155, 128, %s3, [#allocation4]
    $region33: #{tpu_custom_call.1} parent=1 // pred_fallthru
      _
    // Predicated region
    $region34: #{tpu_custom_call.1} parent=1 // pred_check
      _
    $region35: #{tpu_custom_call.1} parent=1 // pred_check_branch
      %159 = sbr.rel (0) target = $region37
    $region36: #{tpu_custom_call.1} parent=1 // pred_region
      %160 = dma.done [#allocation4], 128
    $region37: #{tpu_custom_call.1} parent=1 // pred_fallthru
      _
    %161 = vsyncpa [#allocation3], 1
    %162 = vsyncpa [#allocation6], 1
    %163 = vsyncpa [#allocation4], 1

</llo_original>
